<compile_context>
chip_gen: v7x
topology: tpu7x:2x2x1
jax: 0.10.0
libtpu: 0.0.40
codegen_flags: <defaults>
</compile_context>

<pallas_src>
import jax
import jax.numpy as jnp
from jax.experimental import pallas as pl
from jax.experimental.pallas import tpu as pltpu

POOLING_SIZE = 2
POOLING_STRIDE = 2

_TARGET_BLOCK_BYTES = 4 << 20  # ~4 MiB input slab per grid step


def _down_pool_kernel(x_ref, p_ref, o_ref):
    """(TR, 2*ny*nf) @ (2*ny*nf, oy*nf) -> (TR, oy*nf) on the MXU."""
    o_ref[...] = jnp.dot(
        x_ref[...], p_ref[...], preferred_element_type=jnp.float32
    ).astype(o_ref.dtype)


def _pooling_matrix(ny, nf, dtype):
    """Constant (2*ny*nf, oy*nf) matrix with 0.25 where (di, dj, f) feeds (oy, f)."""
    oy = ny // 2
    r = jnp.arange(2 * ny * nf)
    y_in = (r % (ny * nf)) // nf        # y index of this input column
    f_in = r % nf                        # feature index of this input column
    c = jnp.arange(oy * nf)
    y_out = c // nf                      # pooled-y index of this output column
    f_out = c % nf                       # feature index of this output column
    mask = (f_in[:, None] == f_out[None, :]) & ((y_in[:, None] // 2) == y_out[None, :])
    return jnp.where(mask, 0.25, 0.0).astype(dtype)


def _choose_block_rows(total_rows, row_bytes, target_bytes=_TARGET_BLOCK_BYTES):
    """Rows per grid step: ~target_bytes slabs, multiple of 8, >=2 steps if easy."""
    target = max(8, target_bytes // max(row_bytes, 1))
    target = (target // 8) * 8
    if total_rows <= target:
        # Everything fits in one block; split once (both halves multiples of 8)
        # when possible so a 2-TensorCore chip (v7x) can shard the grid.
        if total_rows % 16 == 0:
            return total_rows // 2
        return total_rows  # full extent is always a legal block dim
    return target


def down_forward(x, pooling_size=POOLING_SIZE, pooling_stride=POOLING_STRIDE):
    """Equivalent of Down.forward.

    Args:
        x: (batch, n_tiles, n_x, n_y, n_features)
    Returns:
        (batch, n_tiles, n_x // 2, n_y // 2, n_features)
    """
    b, t, nx, ny, nf = x.shape
    # The module's output reshape hardcodes n_x // 2, n_y // 2, which is only
    # consistent with kernel_size == stride == 2.
    assert pooling_size == 2 and pooling_stride == 2
    assert nx % 2 == 0 and ny % 2 == 0
    ox, oy = nx // 2, ny // 2
    n = b * t

    c_in = 2 * ny * nf
    c_out = oy * nf
    rows = n * ox

    # Pure row-major reshape: row k = (image i, output-row ox_idx) holds the two
    # contributing x-rows flattened as (di, y, f). No data movement.
    x2 = x.reshape(rows, c_in)
    pool_mat = _pooling_matrix(ny, nf, x.dtype)

    itemsize = jnp.dtype(x.dtype).itemsize
    tr = _choose_block_rows(rows, c_in * itemsize)
    grid = (pl.cdiv(rows, tr),)

    cost = pl.CostEstimate(
        flops=2 * rows * c_in * c_out,
        transcendentals=0,
        bytes_accessed=(rows * c_in + rows * c_out + c_in * c_out) * itemsize,
    )

    out2 = pl.pallas_call(
        _down_pool_kernel,
        out_shape=jax.ShapeDtypeStruct((rows, c_out), x.dtype),
        grid_spec=pltpu.PrefetchScalarGridSpec(
            num_scalar_prefetch=0,
            grid=grid,
            in_specs=[
                pl.BlockSpec((tr, c_in), lambda i: (i, 0)),
                # Small constant pooling matrix; same block every step (resident).
                pl.BlockSpec((c_in, c_out), lambda i: (0, 0)),
            ],
            out_specs=pl.BlockSpec((tr, c_out), lambda i: (i, 0)),
        ),
        compiler_params=pltpu.CompilerParams(
            dimension_semantics=("parallel",),
        ),
        cost_estimate=cost,
    )(x2, pool_mat)

    # Pure reshape back to channels-last 5-D output.
    return out2.reshape(b, t, ox, oy, nf)


if __name__ == "__main__":
    key = jax.random.PRNGKey(0)
    batch, n_tiles, n_x, n_y, n_features = 2, 6, 16, 16, 4
    x = jax.random.normal(
        key, (batch, n_tiles, n_x, n_y, n_features), dtype=jnp.float32
    )

    y = down_forward(x)
    y = jax.block_until_ready(y)

    # Reference (plain JAX) — average pool 2x2 stride 2, channels-last.
    ref = (
        x.reshape(batch, n_tiles, n_x // 2, 2, n_y // 2, 2, n_features)
        .mean(axis=(3, 5))
    )

    assert y.shape == (batch, n_tiles, n_x // 2, n_y // 2, n_features)
    assert jnp.allclose(y, ref, atol=1e-5, rtol=1e-5)
    print("KERNEL_OK")
</pallas_src>

<mosaic_0001>
module attributes {stable_mosaic.version = 11 : i64} {
  func.func @_down_pool_kernel(%arg0: i32, %arg1: memref<48x128xf32, #tpu.memory_space<vmem>>, %arg2: memref<128x32xf32, #tpu.memory_space<vmem>>, %arg3: memref<48x32xf32, #tpu.memory_space<vmem>>) attributes {dimension_semantics = [#tpu.dimension_semantics<parallel>], iteration_bounds = array<i64: 2>, scalar_prefetch = 0 : i64, scratch_operands = 0 : i64, tpu.core_type = #tpu.core_type<tc>, window_params = [{transform_indices = @transform_0, window_bounds = array<i64: 48, 128>}, {pipeline_mode = #tpu.pipeline_mode<synchronous>, transform_indices = @transform_1, window_bounds = array<i64: 128, 32>}, {transform_indices = @transform_2, window_bounds = array<i64: 48, 32>}]} {
    %c0 = arith.constant 0 : index
    %c0_0 = arith.constant 0 : index
    %0 = vector.load %arg1[%c0, %c0_0] : memref<48x128xf32, #tpu.memory_space<vmem>>, vector<48x128xf32>
    %c0_1 = arith.constant 0 : index
    %c0_2 = arith.constant 0 : index
    %1 = vector.load %arg2[%c0_1, %c0_2] : memref<128x32xf32, #tpu.memory_space<vmem>>, vector<128x32xf32>
    %cst = arith.constant dense<0.000000e+00> : vector<48x32xf32>
    %2 = tpu.matmul %0, %1, %cst {dimension_numbers = #tpu.dot_dimension_numbers<[1], [0], [0], [1], [0, 0, 1, 1], [], []>} : vector<48x128xf32>, vector<128x32xf32>, vector<48x32xf32> -> vector<48x32xf32>
    %c0_3 = arith.constant 0 : index
    %c0_4 = arith.constant 0 : index
    %3 = vector.load %arg3[%c0_3, %c0_4] : memref<48x32xf32, #tpu.memory_space<vmem>>, vector<48x32xf32>
    tpu.vector_store %arg3[%c0_3, %c0_4], %2 {strides = array<i32>} : memref<48x32xf32, #tpu.memory_space<vmem>>, vector<48x32xf32>,
    return
  }
  func.func @transform_0(%arg0: i32) -> (i32, i32) {
    %c0_i32 = arith.constant 0 : i32
    %c0_i32_0 = arith.constant 0 : i32
    return %arg0, %c0_i32 : i32, i32
  }
  func.func @transform_1(%arg0: i32) -> (i32, i32) {
    %c0_i32 = arith.constant 0 : i32
    %c0_i32_0 = arith.constant 0 : i32
    %c0_i32_1 = arith.constant 0 : i32
    return %c0_i32, %c0_i32_0 : i32, i32
  }
  func.func @transform_2(%arg0: i32) -> (i32, i32) {
    %c0_i32 = arith.constant 0 : i32
    %c0_i32_0 = arith.constant 0 : i32
    return %arg0, %c0_i32 : i32, i32
  }
}

</mosaic_0001>

<llo_original>
// kernel: tpu_custom_call.1
$region0: #{tpu_custom_call.1}
  #allocation0 [shape = 'u32[]', space=smem, size = 0x4, offset = 0x4, fixed_abs, tag = 'smem constant byte address 0x4 - core index']
  #allocation1 [shape = 'u32[144,128]{1,0:T(1,128)}', space=vmem, size = 0x12000, scoped, tag = 'internal scratch']
  %s0 = inlined_call_operand.vmem [shape: f32[96,128], index: 0, kind: input, shape index: {}]
  %s1 = inlined_call_operand.vmem [shape: f32[128,32], index: 1, kind: input, shape index: {}]
  %s2 = inlined_call_operand.vmem [shape: f32[96,32], index: 2, kind: output, shape index: {}]
  %s3 = sld [smem:[#allocation0]]
  $region41: #{tpu_custom_call.1} parent=0
    _
  %s5 = ssub.s32 1, %s3
  %s6 = scalar_select 0, %s5, %s3
  loop: start=0, step=1, limit=4
  $region2: #{tpu_custom_call.1} parent=0 // loop_pre_header
    _
  $region3: #{tpu_custom_call.1} parent=0 // loop_header
    %s8 = sphi 0, %s12
    %p9 = scmp.ge.s32.totalorder %s8, 4
    %s18 = sphi 0, %s20
    %s21 = sphi 0, %s18
    %s22 = sphi 0, %s21
    %s38 = sphi 0, %s22
    %s42 = sphi 0, %s42
    %s44 = sphi 0, %s42
    %s45 = sphi 0, %s44
    %s59 = sphi 0, %s45
    %s65 = sphi 0, %s67
    %s68 = sphi 0, %s65
    %s69 = sphi 0, %s68
    %s85 = sphi 0, %s69
  $region4: #{tpu_custom_call.1} parent=0 // loop_header_branch
    %11 = sbr.rel (%p9) target = $region8
  $region5: #{tpu_custom_call.1} parent=0 // loop_body
    %s13 = ssub.s32 %s8, 1
    %s14 = ssub.s32 %s8, 2
    %s15 = sadd.s32 %s8, 1
    %s16 = ssub.s32 %s8, %s15
    %p17 = scmp.eq.s32.totalorder %s16, 0
    %s19 = sadd.s32 %s18, 1
    %s20 = scalar_select %p17, %s18, %s19
    %p23 = pneg %p17
    %p24 = scmp.eq.s32.totalorder %s8, 1
    %p25 = por %p23, %p24
    %p26 = scmp.ne.s32.totalorder %s18, %s21
    %p27 = scmp.eq.s32.totalorder %s8, 0
    %p28 = por %p26, %p27
    %p29 = scmp.ne.s32.totalorder %s18, %s21
    %p30 = scmp.eq.s32.totalorder %s13, 1
    %p31 = por %p29, %p30
    %p32 = scmp.ne.s32.totalorder %s21, %s22
    %p33 = scmp.eq.s32.totalorder %s13, 0
    %p34 = por %p32, %p33
    %p35 = scmp.ne.s32.totalorder %s21, %s22
    %p36 = scmp.eq.s32.totalorder %s14, 1
    %p37 = por %p35, %p36
    %p39 = scmp.ne.s32.totalorder %s22, %s38
    %p40 = scmp.eq.s32.totalorder %s14, 0
    %p41 = por %p39, %p40
    %s43 = sadd.s32 %s42, 1
    %p46 = scmp.eq.s32.totalorder %s8, 1
    %p47 = scmp.ne.s32.totalorder %s42, %s44
    %p48 = scmp.eq.s32.totalorder %s8, 0
    %p49 = por %p47, %p48
    %p50 = scmp.ne.s32.totalorder %s42, %s44
    %p51 = scmp.eq.s32.totalorder %s13, 1
    %p52 = por %p50, %p51
    %p53 = scmp.ne.s32.totalorder %s44, %s45
    %p54 = scmp.eq.s32.totalorder %s13, 0
    %p55 = por %p53, %p54
    %p56 = scmp.ne.s32.totalorder %s44, %s45
    %p57 = scmp.eq.s32.totalorder %s14, 1
    %p58 = por %p56, %p57
    %p60 = scmp.ne.s32.totalorder %s45, %s59
    %p61 = scmp.eq.s32.totalorder %s14, 0
    %p62 = por %p60, %p61
    %s63 = ssub.s32 %s8, %s15
    %p64 = scmp.eq.s32.totalorder %s63, 0
    %s66 = sadd.s32 %s65, 1
    %s67 = scalar_select %p64, %s65, %s66
    %p70 = pneg %p64
    %p71 = scmp.eq.s32.totalorder %s8, 1
    %p72 = por %p70, %p71
    %p73 = scmp.ne.s32.totalorder %s65, %s68
    %p74 = scmp.eq.s32.totalorder %s8, 0
    %p75 = por %p73, %p74
    %p76 = scmp.ne.s32.totalorder %s65, %s68
    %p77 = scmp.eq.s32.totalorder %s13, 1
    %p78 = por %p76, %p77
    %p79 = scmp.ne.s32.totalorder %s68, %s69
    %p80 = scmp.eq.s32.totalorder %s13, 0
    %p81 = por %p79, %p80
    %p82 = scmp.ne.s32.totalorder %s68, %s69
    %p83 = scmp.eq.s32.totalorder %s14, 1
    %p84 = por %p82, %p83
    %p86 = scmp.ne.s32.totalorder %s69, %s85
    %p87 = scmp.eq.s32.totalorder %s14, 0
    %p88 = por %p86, %p87
    %p89 = scmp.le.s32.totalorder 1, %s8
    %p90 = scmp.lt.s32.totalorder %s8, 3
    %p91 = pnand %p89, %p90
    %p92 = pneg %p91
    // Predicated region
    $region9: #{tpu_custom_call.1} parent=5 // pred_check
      _
    $region10: #{tpu_custom_call.1} parent=5 // pred_check_branch
      %94 = sbr.rel (%p91) target = $region12
    $region11: #{tpu_custom_call.1} parent=5 // pred_region
      %s95 = ssub.s32 %s8, 1
      // Predicated region
      $region13: #{tpu_custom_call.1} parent=11 // pred_check
        %p96 = pneg %p55
      $region14: #{tpu_custom_call.1} parent=11 // pred_check_branch
        %98 = sbr.rel (%p96) target = $region16
      $region15: #{tpu_custom_call.1} parent=11 // pred_region
        _
      $region16: #{tpu_custom_call.1} parent=11 // pred_fallthru
        _
    $region12: #{tpu_custom_call.1} parent=5 // pred_fallthru
      _
    %p99 = scmp.lt.s32.totalorder %s8, 2
    // Predicated region
    $region17: #{tpu_custom_call.1} parent=5 // pred_check
      %p100 = pneg %p99
    $region18: #{tpu_custom_call.1} parent=5 // pred_check_branch
      %102 = sbr.rel (%p100) target = $region20
    $region19: #{tpu_custom_call.1} parent=5 // pred_region
      // Predicated region
      $region21: #{tpu_custom_call.1} parent=19 // pred_check
        %p103 = pneg %p28
      $region22: #{tpu_custom_call.1} parent=19 // pred_check_branch
        %105 = sbr.rel (%p103) target = $region24
      $region23: #{tpu_custom_call.1} parent=19 // pred_region
        %s106 = smul.u32 6, %s8
        %p107 = scmp.lt.s32.totalorder %s106, 11
        %s108 = scalar_select %p107, %s106, 11
        %s109 = smul.addr %s108, 8
        %s110 = scalar_lea.vmem %s0, %s109
        %s111 = smul.u32 6, %s8
      $region24: #{tpu_custom_call.1} parent=19 // pred_fallthru
        _
    $region20: #{tpu_custom_call.1} parent=5 // pred_fallthru
      _
    %p112 = scmp.le.s32.totalorder 1, %s8
    %p113 = scmp.lt.s32.totalorder %s8, 3
    %p114 = pnand %p112, %p113
    %p115 = pneg %p114
    // Predicated region
    $region25: #{tpu_custom_call.1} parent=5 // pred_check
      _
    $region26: #{tpu_custom_call.1} parent=5 // pred_check_branch
      %117 = sbr.rel (%p114) target = $region28
    $region27: #{tpu_custom_call.1} parent=5 // pred_region
      %s118 = ssub.s32 %s8, 1
      %s119 = smul.u32 6, %s13
      %p120 = scmp.lt.s32.totalorder %s119, 11
      %s121 = scalar_select %p120, %s119, 11
      %s122 = smul.addr %s121, 8
      %s123 = scalar_lea.vmem %s0, %s122
      %p124 = pneg %p34
      %p125 = pneg %p31
      %p126 = pneg %p55
      %p127 = pneg %p52
      %p128 = pneg %p81
      %p129 = pneg %p78
      %s130 = smul.u32 6, %s13
      %p131 = scmp.lt.s32.totalorder %s130, 11
      %s132 = scalar_select %p131, %s130, 11
      %s133 = smul.addr %s132, 8
      %s134 = scalar_lea.vmem %s2, %s133
      %s135 = smul.u32 6, %s13
      %p136 = scmp.lt.s32.totalorder %s135, 11
      %s137 = scalar_select %p136, %s135, 11
      %s138 = smul.addr %s137, 8
      %s139 = scalar_lea.vmem %s0, %s138
      %s140 = smul.u32 6, %s13
      %s141 = smul.u32 6, %s13
      %p142 = scmp.lt.s32.totalorder %s141, 11
      %s143 = scalar_select %p142, %s141, 11
      %s144 = smul.addr %s143, 8
      %s145 = scalar_lea.vmem %s2, %s144
      %s146 = smul.u32 6, %s13
      %v147 = vld [vmem:[%s139] sm:$0xff]
      %v148 = vld [vmem:[%s139 + $0x8] sm:$0xff]
      %v149 = vld [vmem:[%s139 + $0x10] sm:$0xff]
      %v150 = vld [vmem:[%s139 + $0x18] sm:$0xff]
      %v151 = vld [vmem:[%s139 + $0x20] sm:$0xff]
      %v152 = vld [vmem:[%s139 + $0x28] sm:$0xff]
      %v153 = vld [vmem:[%s1] sm:$0xff]
      %v154 = vld [vmem:[%s1 + $0x8] sm:$0xff]
      %v155 = vld [vmem:[%s1 + $0x10] sm:$0xff]
      %v156 = vld [vmem:[%s1 + $0x18] sm:$0xff]
      %v157 = vld [vmem:[%s1 + $0x20] sm:$0xff]
      %v158 = vld [vmem:[%s1 + $0x28] sm:$0xff]
      %v159 = vld [vmem:[%s1 + $0x30] sm:$0xff]
      %v160 = vld [vmem:[%s1 + $0x38] sm:$0xff]
      %v161 = vld [vmem:[%s1 + $0x40] sm:$0xff]
      %v162 = vld [vmem:[%s1 + $0x48] sm:$0xff]
      %v163 = vld [vmem:[%s1 + $0x50] sm:$0xff]
      %v164 = vld [vmem:[%s1 + $0x58] sm:$0xff]
      %v165 = vld [vmem:[%s1 + $0x60] sm:$0xff]
      %v166 = vld [vmem:[%s1 + $0x68] sm:$0xff]
      %v167 = vld [vmem:[%s1 + $0x70] sm:$0xff]
      %v168 = vld [vmem:[%s1 + $0x78] sm:$0xff]
      %169 = vmatprep.subr.mxu0 0.0
      %170 = vmatpush1.msra.mxu0 %v153
      %171 = vmatprep.subr.mxu0 0.0
      %172 = vmatpush1.msra.mxu0 %v154
      %173 = vmatprep.subr.mxu0 0.0
      %174 = vmatpush1.msra.mxu0 %v155
      %175 = vmatprep.subr.mxu0 0.0
      %176 = vmatpush1.msra.mxu0 %v156
      %177 = vmatprep.subr.mxu0 0.0
      %178 = vmatpush1.msra.mxu0 %v157
      %179 = vmatprep.subr.mxu0 0.0
      %180 = vmatpush1.msra.mxu0 %v158
      %181 = vmatprep.subr.mxu0 0.0
      %182 = vmatpush1.msra.mxu0 %v159
      %183 = vmatprep.subr.mxu0 0.0
      %184 = vmatpush1.msra.mxu0 %v160
      %185 = vmatprep.subr.mxu0 0.0
      %186 = vmatpush1.msra.mxu0 %v161
      %187 = vmatprep.subr.mxu0 0.0
      %188 = vmatpush1.msra.mxu0 %v162
      %189 = vmatprep.subr.mxu0 0.0
      %190 = vmatpush1.msra.mxu0 %v163
      %191 = vmatprep.subr.mxu0 0.0
      %192 = vmatpush1.msra.mxu0 %v164
      %193 = vmatprep.subr.mxu0 0.0
      %194 = vmatpush1.msra.mxu0 %v165
      %195 = vmatprep.subr.mxu0 0.0
      %196 = vmatpush1.msra.mxu0 %v166
      %197 = vmatprep.subr.mxu0 0.0
      %198 = vmatpush1.msra.mxu0 %v167
      %199 = vmatprep.subr.mxu0 0.0
      %200 = vmatpush1.msra.mxu0 %v168
      %201 = vmatprep.subr.mxu0 0.0
      %202 = vmatpush1.msra.mxu0 0.0
      %203 = vmatprep.subr.mxu0 0.0
      %204 = vmatpush1.msra.mxu0 0.0
      %205 = vmatprep.subr.mxu0 0.0
      %206 = vmatpush1.msra.mxu0 0.0
      %207 = vmatprep.subr.mxu0 0.0
      %208 = vmatpush1.msra.mxu0 0.0
      %209 = vmatprep.subr.mxu0 0.0
      %210 = vmatpush1.msra.mxu0 0.0
      %211 = vmatprep.subr.mxu0 0.0
      %212 = vmatpush1.msra.mxu0 0.0
      %213 = vmatprep.subr.mxu0 0.0
      %214 = vmatpush1.msra.mxu0 0.0
      %215 = vmatprep.subr.mxu0 0.0
      %216 = vmatpush1.msra.mxu0 0.0
      %217 = vmatprep.subr.mxu0 0.0
      %218 = vmatpush1.msra.mxu0 0.0
      %219 = vmatprep.subr.mxu0 0.0
      %220 = vmatpush1.msra.mxu0 0.0
      %221 = vmatprep.subr.mxu0 0.0
      %222 = vmatpush1.msra.mxu0 0.0
      %223 = vmatprep.subr.mxu0 0.0
      %224 = vmatpush1.msra.mxu0 0.0
      %225 = vmatprep.subr.mxu0 0.0
      %226 = vmatpush1.msra.mxu0 0.0
      %227 = vmatprep.subr.mxu0 0.0
      %228 = vmatpush1.msra.mxu0 0.0
      %229 = vmatprep.subr.mxu0 0.0
      %230 = vmatpush1.msra.mxu0 0.0
      %231 = vmatprep.subr.mxu0 0.0
      %232 = vmatpush1.msra.mxu0 0.0
      %233 = vmatprep.mubr.f32.mxu0 0.0
      %234 = vmatmul.mubr.f32.gmra.mrb[0].mxu0 %v147
      %v235 = vpop.f32.mrb[0].mxu0
      %v236 = vadd.f32 0.0, %v235
      %v237 = vpop.f32.mrb[0].mxu0
      %238 = vmatprep.mubr.f32.mxu0 0.0
      %239 = vmatmul.mubr.f32.gmra.mrb[0].mxu0 %v148
      %v240 = vpop.f32.mrb[0].mxu0
      %v241 = vadd.f32 0.0, %v240
      %v242 = vpop.f32.mrb[0].mxu0
      %243 = vmatprep.mubr.f32.mxu0 0.0
      %244 = vmatmul.mubr.f32.gmra.mrb[0].mxu0 %v149
      %v245 = vpop.f32.mrb[0].mxu0
      %v246 = vadd.f32 0.0, %v245
      %v247 = vpop.f32.mrb[0].mxu0
      %248 = vmatprep.mubr.f32.mxu0 0.0
      %249 = vmatmul.mubr.f32.gmra.mrb[0].mxu0 %v150
      %v250 = vpop.f32.mrb[0].mxu0
      %v251 = vadd.f32 0.0, %v250
      %v252 = vpop.f32.mrb[0].mxu0
      %253 = vmatprep.mubr.f32.mxu0 0.0
      %254 = vmatmul.mubr.f32.gmra.mrb[0].mxu0 %v151
      %v255 = vpop.f32.mrb[0].mxu0
      %v256 = vadd.f32 0.0, %v255
      %v257 = vpop.f32.mrb[0].mxu0
      %258 = vmatprep.mubr.f32.mxu0 0.0
      %259 = vmatmul.mubr.f32.gmra.mrb[0].mxu0 %v152
      %v260 = vpop.f32.mrb[0].mxu0
      %v261 = vadd.f32 0.0, %v260
      %v262 = vpop.f32.mrb[0].mxu0
      %263 = vdwg.mxu0
      %vm264 = vcmask 261120
      %265 = vst.msk [vmem:[%s145] sm:$0xff] %vm264, %v236
      %266 = vst.msk [vmem:[%s145 + $0x8] sm:$0xff] %vm264, %v241
      %267 = vst.msk [vmem:[%s145 + $0x10] sm:$0xff] %vm264, %v246
      %268 = vst.msk [vmem:[%s145 + $0x18] sm:$0xff] %vm264, %v251
      %269 = vst.msk [vmem:[%s145 + $0x20] sm:$0xff] %vm264, %v256
      %270 = vst.msk [vmem:[%s145 + $0x28] sm:$0xff] %vm264, %v261
      %s271 = smul.u32 6, %s13
      %p272 = scmp.lt.s32.totalorder %s271, 11
      %s273 = scalar_select %p272, %s271, 11
      %s274 = smul.addr %s273, 8
      %s275 = scalar_lea.vmem %s2, %s274
      // Predicated region
      $region29: #{tpu_custom_call.1} parent=27 // pred_check
        %p276 = pneg %p78
      $region30: #{tpu_custom_call.1} parent=27 // pred_check_branch
        %278 = sbr.rel (%p276) target = $region32
      $region31: #{tpu_custom_call.1} parent=27 // pred_region
        %s279 = smul.u32 6, %s13
      $region32: #{tpu_custom_call.1} parent=27 // pred_fallthru
        _
    $region28: #{tpu_custom_call.1} parent=5 // pred_fallthru
      _
    %p280 = scmp.le.s32.totalorder 2, %s8
    // Predicated region
    $region33: #{tpu_custom_call.1} parent=5 // pred_check
      %p281 = pneg %p280
    $region34: #{tpu_custom_call.1} parent=5 // pred_check_branch
      %283 = sbr.rel (%p281) target = $region36
    $region35: #{tpu_custom_call.1} parent=5 // pred_region
      %s284 = ssub.s32 %s8, 2
      // Predicated region
      $region37: #{tpu_custom_call.1} parent=35 // pred_check
        %p285 = pneg %p84
      $region38: #{tpu_custom_call.1} parent=35 // pred_check_branch
        %287 = sbr.rel (%p285) target = $region40
      $region39: #{tpu_custom_call.1} parent=35 // pred_region
        %s288 = smul.u32 6, %s14
        %p289 = scmp.lt.s32.totalorder %s288, 11
        %s290 = scalar_select %p289, %s288, 11
        %s291 = smul.addr %s290, 8
        %s292 = scalar_lea.vmem %s2, %s291
      $region40: #{tpu_custom_call.1} parent=35 // pred_fallthru
        _
    $region36: #{tpu_custom_call.1} parent=5 // pred_fallthru
      _
  $region6: #{tpu_custom_call.1} parent=0 // loop_footer
    %s12 = sadd.s32 1, %s8
  $region7: #{tpu_custom_call.1} parent=0 // loop_footer_branch
    %7 = sbr.rel target = $region3
  $region8: #{tpu_custom_call.1} parent=0 // loop_exit
    _

</llo_original>
